<compile_context>
chip_gen: v7x
topology: tpu7x:2x2x1
jax: 0.10.0
libtpu: 0.0.40
codegen_flags: <defaults>
</compile_context>

<pallas_src>
import math
import functools

import jax
import jax.numpy as jnp
from jax.experimental import pallas as pl
from jax.experimental.pallas import tpu as pltpu


_VMEM_LIMIT_BYTES = 48 * 1024 * 1024   # > v5e/v6e scoped defaults, < v7x 64 MiB physical


# ----------------------------------------------------------------------------
# Tiled linear projection kernel (MXU matmul + bias), row-parallel grid
# ----------------------------------------------------------------------------

def _linear_kernel(x_ref, w_ref, b_ref, o_ref):
    # x: (TR, Cin), w: (Cin, Cout), b: (1, Cout)  ->  o: (TR, Cout)
    o_ref[...] = (
        jnp.dot(x_ref[...], w_ref[...], preferred_element_type=jnp.float32)
        + b_ref[...]
    )


def _pick_row_block(rows, cap=512):
    """Largest divisor of `rows` that is a multiple of 8 and <= cap, else full rows."""
    top = min(cap, rows)
    top -= top % 8
    for t in range(top, 0, -8):
        if rows % t == 0:
            return t
    return rows


def pallas_linear(x2d, w, b, row_block=None):
    R, Cin = x2d.shape
    Cout = w.shape[1]
    tr = row_block if row_block is not None else _pick_row_block(R)
    assert R % tr == 0
    grid = (R // tr,)
    return pl.pallas_call(
        _linear_kernel,
        out_shape=jax.ShapeDtypeStruct((R, Cout), jnp.float32),
        grid=grid,
        in_specs=[
            pl.BlockSpec((tr, Cin), lambda i: (i, 0)),
            pl.BlockSpec((Cin, Cout), lambda i: (0, 0)),
            pl.BlockSpec((1, Cout), lambda i: (0, 0)),
        ],
        out_specs=pl.BlockSpec((tr, Cout), lambda i: (i, 0)),
        compiler_params=pltpu.CompilerParams(
            dimension_semantics=("parallel",),
            vmem_limit_bytes=_VMEM_LIMIT_BYTES,
        ),
    )(x2d, w, b.reshape(1, Cout))


# ----------------------------------------------------------------------------
# MSDA core kernel (per-head gather matmul, per-(level, head) double-buffered DMA)
# ----------------------------------------------------------------------------

def _msda_core_kernel(locx_ref, locy_ref, logit_ref, value_hbm,
                      out_ref, attw_ref,
                      vbuf, sem, *,
                      spatial_shapes, level_starts,
                      n_heads, n_levels, n_points, head_dim, tq):
    # locx/locy/logits block : (1, tq, n_heads * n_levels * n_points)
    # value_hbm (HBM, ANY)   : (N, n_heads, Len_in, head_dim)
    # out block              : (1, tq, n_heads * head_dim)
    # vbuf scratch           : (2, max_level_rows, head_dim)  double-buffered slabs
    n = pl.program_id(0)
    LP = n_levels * n_points
    T = n_levels * n_heads

    def start_copy(t):
        l, h = divmod(t, n_heads)
        Hl, Wl = spatial_shapes[l]
        rows = Hl * Wl
        slot = t % 2
        cp = pltpu.make_async_copy(
            value_hbm.at[n, h, pl.ds(level_starts[l], rows), :],
            vbuf.at[slot, pl.ds(0, rows), :],
            sem.at[slot],
        )
        cp.start()
        return cp

    # prime the DMA for (level 0, head 0); overlap the softmax with the transfer
    copies = [start_copy(0)]

    logits = logit_ref[0]                                        # (tq, H*L*P)
    locx = locx_ref[0]
    locy = locy_ref[0]

    # per-head softmax over the (L*P) logits
    attws = []
    for h in range(n_heads):
        lg = logits[:, h * LP:(h + 1) * LP]
        mx = jnp.max(lg, axis=-1, keepdims=True)
        ex = jnp.exp(lg - mx)
        inv = pl.reciprocal(jnp.sum(ex, axis=-1, keepdims=True), approx=True)
        attws.append(ex * inv)
    attw_ref[0] = jnp.concatenate(attws, axis=-1)                # one lane-dense store

    accs = [jnp.zeros((tq, head_dim), dtype=jnp.float32) for _ in range(n_heads)]

    for t in range(T):
        l, h = divmod(t, n_heads)
        Hl, Wl = spatial_shapes[l]
        rows = Hl * Wl
        slot = t % 2

        copies[t].wait()
        if t + 1 < T:                                            # prefetch next slab
            copies.append(start_copy(t + 1))

        # accumulate one per-head gather-weight matrix for this level across
        # points/corners (VPU), then one MXU dot against the (rows, head_dim) slab.
        col = jax.lax.broadcasted_iota(jnp.int32, (tq, rows), 1)
        gw = jnp.zeros((tq, rows), dtype=jnp.float32)
        aw_h = attws[h]                                          # (tq, L*P)

        for p in range(n_points):
            c = (h * n_levels + l) * n_points + p
            # grid_sample semantics (align_corners=False): ix = loc_x * W - 0.5
            ix = locx[:, c:c + 1] * float(Wl) - 0.5              # (tq, 1)
            iy = locy[:, c:c + 1] * float(Hl) - 0.5
            x0 = jnp.floor(ix)
            y0 = jnp.floor(iy)
            fx = ix - x0
            fy = iy - y0
            x0i = x0.astype(jnp.int32)
            y0i = y0.astype(jnp.int32)
            aw = aw_h[:, l * n_points + p:l * n_points + p + 1]  # (tq, 1)
            for dy in (0, 1):
                for dx in (0, 1):
                    xc = x0i + dx
                    yc = y0i + dy
                    bw = (fx if dx else 1.0 - fx) * (fy if dy else 1.0 - fy)
                    valid = (xc >= 0) & (xc < Wl) & (yc >= 0) & (yc < Hl)
                    w = jnp.where(valid, bw * aw, 0.0)           # zero padding outside
                    xs = jnp.clip(xc, 0, Wl - 1)
                    ys = jnp.clip(yc, 0, Hl - 1)
                    r = ys * Wl + xs                             # level-local row index
                    gw = gw + jnp.where(col == r, w, 0.0)

        slab = vbuf[slot, :rows, :]                              # (rows, head_dim) f32
        accs[h] = accs[h] + jnp.dot(gw.astype(jnp.bfloat16),
                                    slab.astype(jnp.bfloat16),
                                    preferred_element_type=jnp.float32)

    out_ref[0] = jnp.concatenate(accs, axis=-1)                  # (tq, n_heads*head_dim)


def msda_core(value_nhld, locx, locy, logits, *, spatial_shapes, level_starts,
              n_heads, n_levels, n_points, head_dim, q_tile):
    N, _, Len_in, _ = value_nhld.shape
    _, Len_q, HLP = locx.shape
    d_model = n_heads * head_dim
    tq = q_tile
    assert Len_q % tq == 0, "q_tile must divide Len_q"
    num_q_tiles = Len_q // tq
    max_rows = max(h * w for h, w in spatial_shapes)

    kernel = functools.partial(
        _msda_core_kernel,
        spatial_shapes=tuple(spatial_shapes),
        level_starts=tuple(level_starts),
        n_heads=n_heads, n_levels=n_levels, n_points=n_points,
        head_dim=head_dim, tq=tq,
    )
    out, attw = pl.pallas_call(
        kernel,
        out_shape=(
            jax.ShapeDtypeStruct((N, Len_q, d_model), jnp.float32),
            jax.ShapeDtypeStruct((N, Len_q, HLP), jnp.float32),
        ),
        grid=(N, num_q_tiles),
        in_specs=[
            pl.BlockSpec((1, tq, HLP), lambda n, q: (n, q, 0)),
            pl.BlockSpec((1, tq, HLP), lambda n, q: (n, q, 0)),
            pl.BlockSpec((1, tq, HLP), lambda n, q: (n, q, 0)),
            pl.BlockSpec(memory_space=pl.ANY),      # value stays in HBM; per-slab DMA
        ],
        out_specs=(
            pl.BlockSpec((1, tq, d_model), lambda n, q: (n, q, 0)),
            pl.BlockSpec((1, tq, HLP), lambda n, q: (n, q, 0)),
        ),
        scratch_shapes=[
            pltpu.VMEM((2, max_rows, head_dim), jnp.float32),   # double-buffered slabs
            pltpu.SemaphoreType.DMA((2,)),
        ],
        compiler_params=pltpu.CompilerParams(
            dimension_semantics=("parallel", "parallel"),
            vmem_limit_bytes=_VMEM_LIMIT_BYTES,
        ),
    )(locx, locy, logits, value_nhld)
    return out, attw


# ----------------------------------------------------------------------------
# Parameter init (matches MSDeformAttn._reset_parameters, deterministic)
# ----------------------------------------------------------------------------

def init_params(key, d_model, n_heads, n_levels, n_points):
    def xavier_uniform(k, fan_in, fan_out):
        bound = math.sqrt(6.0 / (fan_in + fan_out))
        return jax.random.uniform(k, (fan_in, fan_out), jnp.float32, -bound, bound)

    kv, ko = jax.random.split(key, 2)

    # sampling_offsets: weight = 0, bias = directional grid init
    thetas = jnp.arange(n_heads, dtype=jnp.float32) * (2.0 * math.pi / n_heads)
    grid = jnp.stack([jnp.cos(thetas), jnp.sin(thetas)], axis=-1)            # (M, 2)
    grid = grid / jnp.max(jnp.abs(grid), axis=-1, keepdims=True)
    grid = jnp.tile(grid[:, None, None, :], (1, n_levels, n_points, 1))      # (M, L, P, 2)
    scale = jnp.arange(1, n_points + 1, dtype=jnp.float32)[None, None, :, None]
    grid = grid * scale

    params = {
        "w_off": jnp.zeros((d_model, n_heads * n_levels * n_points * 2), jnp.float32),
        "b_off": grid.reshape(-1),
        "w_attn": jnp.zeros((d_model, n_heads * n_levels * n_points), jnp.float32),
        "b_attn": jnp.zeros((n_heads * n_levels * n_points,), jnp.float32),
        "w_val": xavier_uniform(kv, d_model, d_model),
        "b_val": jnp.zeros((d_model,), jnp.float32),
        "w_out": xavier_uniform(ko, d_model, d_model),
        "b_out": jnp.zeros((d_model,), jnp.float32),
    }
    return params


# ----------------------------------------------------------------------------
# Forward pass (MSDeformAttn.forward)
# ----------------------------------------------------------------------------

def _pick_q_tile(len_q, cap=512):
    """Largest divisor of len_q that is a multiple of 8 and <= cap, else full len_q."""
    top = min(cap, len_q)
    top -= top % 8
    for t in range(top, 0, -8):
        if len_q % t == 0:
            return t
    return len_q   # full extent (always a legal block)


def ms_deform_attn_forward(params, query, reference_points, input_flatten,
                           spatial_shapes, *, n_heads, n_levels, n_points,
                           input_padding_mask=None, q_tile=None):
    N, Len_q, C = query.shape
    _, Len_in, _ = input_flatten.shape
    d_model = C
    head_dim = d_model // n_heads
    assert sum(h * w for h, w in spatial_shapes) == Len_in

    level_starts = [0]
    for (h, w) in spatial_shapes[:-1]:
        level_starts.append(level_starts[-1] + h * w)

    if q_tile is None:
        q_tile = _pick_q_tile(Len_q)

    # value projection (tiled Pallas matmul)
    value = pallas_linear(input_flatten.reshape(N * Len_in, C),
                          params["w_val"], params["b_val"]).reshape(N, Len_in, C)
    if input_padding_mask is not None:
        value = jnp.where(input_padding_mask[..., None], 0.0, value)

    # fused sampling-offsets + attention-logits projection (one wide Pallas matmul)
    off_cols = n_heads * n_levels * n_points * 2
    w_qproj = jnp.concatenate([params["w_off"], params["w_attn"]], axis=1)
    b_qproj = jnp.concatenate([params["b_off"], params["b_attn"]], axis=0)
    q2d = query.reshape(N * Len_q, C)
    proj = pallas_linear(q2d, w_qproj, b_qproj)
    offs = proj[:, :off_cols].reshape(N, Len_q, n_heads, n_levels, n_points, 2)
    logits = proj[:, off_cols:].reshape(N, Len_q, n_heads * n_levels * n_points)

    # sampling locations (plain-JAX glue, broadcast arithmetic on small tensors)
    if reference_points.shape[-1] == 2:
        offset_normalizer = jnp.array([[w, h] for (h, w) in spatial_shapes],
                                      dtype=jnp.float32)                      # (L, 2) = (W, H)
        sampling_locations = (reference_points[:, :, None, :, None, :]
                              + offs / offset_normalizer[None, None, None, :, None, :])
    elif reference_points.shape[-1] == 4:
        sampling_locations = (reference_points[:, :, None, :, None, :2]
                              + offs / n_points
                              * reference_points[:, :, None, :, None, 2:] * 0.5)
    else:
        raise ValueError("Last dim of reference_points must be 2 or 4")

    # rearrange for the core kernel (cheap reshapes/transposes in the wrapper)
    value_nhld = value.reshape(N, Len_in, n_heads, head_dim).transpose(0, 2, 1, 3)
    locx = sampling_locations[..., 0].reshape(N, Len_q, n_heads * n_levels * n_points)
    locy = sampling_locations[..., 1].reshape(N, Len_q, n_heads * n_levels * n_points)

    core_out, attw_flat = msda_core(
        value_nhld, locx, locy, logits,
        spatial_shapes=spatial_shapes, level_starts=level_starts,
        n_heads=n_heads, n_levels=n_levels, n_points=n_points,
        head_dim=head_dim, q_tile=q_tile)

    # output projection (Pallas matmul)
    output = pallas_linear(core_out.reshape(N * Len_q, d_model),
                           params["w_out"], params["b_out"]).reshape(N, Len_q, d_model)

    attention_weights = attw_flat.reshape(N, Len_q, n_heads, n_levels, n_points)
    return output, sampling_locations, attention_weights


# ----------------------------------------------------------------------------
# Main
# ----------------------------------------------------------------------------

if __name__ == "__main__":
    d_model, n_heads, n_levels, n_points = 32, 4, 2, 4
    N, Len_q = 2, 8
    spatial_shapes = [(8, 8), (4, 4)]          # static (H, W) per level
    Len_in = sum(h * w for h, w in spatial_shapes)

    key = jax.random.PRNGKey(0)
    kp, kq, kr, ki = jax.random.split(key, 4)

    params = init_params(kp, d_model, n_heads, n_levels, n_points)
    query = jax.random.normal(kq, (N, Len_q, d_model), jnp.float32)
    reference_points = jax.random.uniform(kr, (N, Len_q, n_levels, 2), jnp.float32)
    input_flatten = jax.random.normal(ki, (N, Len_in, d_model), jnp.float32)

    output, sampling_locations, attention_weights = ms_deform_attn_forward(
        params, query, reference_points, input_flatten, spatial_shapes,
        n_heads=n_heads, n_levels=n_levels, n_points=n_points,
        input_padding_mask=None)

    jax.block_until_ready((output, sampling_locations, attention_weights))

    # light sanity checks
    assert output.shape == (N, Len_q, d_model)
    assert sampling_locations.shape == (N, Len_q, n_heads, n_levels, n_points, 2)
    assert attention_weights.shape == (N, Len_q, n_heads, n_levels, n_points)
    assert bool(jnp.all(jnp.isfinite(output)))
    # approx EUP reciprocal in the softmax -> allow a slightly looser tolerance
    wsum = jnp.sum(attention_weights, axis=(-2, -1))
    assert bool(jnp.allclose(wsum, 1.0, atol=5e-3))

    print("KERNEL_OK")
</pallas_src>

<mosaic_0001>
module attributes {stable_mosaic.version = 11 : i64} {
  func.func @_linear_kernel(%arg0: i32, %arg1: memref<160x32xf32, #tpu.memory_space<vmem>>, %arg2: memref<32x32xf32, #tpu.memory_space<vmem>>, %arg3: memref<1x32xf32, #tpu.memory_space<vmem>>, %arg4: memref<160x32xf32, #tpu.memory_space<vmem>>) attributes {dimension_semantics = [#tpu.dimension_semantics<parallel>], iteration_bounds = array<i64: 1>, scalar_prefetch = 0 : i64, scratch_operands = 0 : i64, tpu.core_type = #tpu.core_type<tc>, window_params = [{transform_indices = @transform_0, window_bounds = array<i64: 160, 32>}, {pipeline_mode = #tpu.pipeline_mode<synchronous>, transform_indices = @transform_1, window_bounds = array<i64: 32, 32>}, {pipeline_mode = #tpu.pipeline_mode<synchronous>, transform_indices = @transform_2, window_bounds = array<i64: 1, 32>}, {transform_indices = @transform_3, window_bounds = array<i64: 160, 32>}]} {
    %c0 = arith.constant 0 : index
    %c0_0 = arith.constant 0 : index
    %0 = vector.load %arg1[%c0, %c0_0] : memref<160x32xf32, #tpu.memory_space<vmem>>, vector<160x32xf32>
    %c0_1 = arith.constant 0 : index
    %c0_2 = arith.constant 0 : index
    %1 = vector.load %arg2[%c0_1, %c0_2] : memref<32x32xf32, #tpu.memory_space<vmem>>, vector<32x32xf32>
    %cst = arith.constant dense<0.000000e+00> : vector<160x32xf32>
    %2 = tpu.matmul %0, %1, %cst {dimension_numbers = #tpu.dot_dimension_numbers<[1], [0], [0], [1], [0, 0, 1, 1], [], []>} : vector<160x32xf32>, vector<32x32xf32>, vector<160x32xf32> -> vector<160x32xf32>
    %c0_3 = arith.constant 0 : index
    %c0_4 = arith.constant 0 : index
    %3 = vector.load %arg3[%c0_3, %c0_4] : memref<1x32xf32, #tpu.memory_space<vmem>>, vector<1x32xf32>
    %4 = vector.broadcast %3 : vector<1x32xf32> to vector<160x32xf32>
    %5 = arith.addf %2, %4 : vector<160x32xf32>
    %c0_5 = arith.constant 0 : index
    %c0_6 = arith.constant 0 : index
    %6 = vector.load %arg4[%c0_5, %c0_6] : memref<160x32xf32, #tpu.memory_space<vmem>>, vector<160x32xf32>
    tpu.vector_store %arg4[%c0_5, %c0_6], %5 {strides = array<i32>} : memref<160x32xf32, #tpu.memory_space<vmem>>, vector<160x32xf32>,
    return
  }
  func.func @transform_0(%arg0: i32) -> (i32, i32) {
    %c0_i32 = arith.constant 0 : i32
    %c0_i32_0 = arith.constant 0 : i32
    return %arg0, %c0_i32 : i32, i32
  }
  func.func @transform_1(%arg0: i32) -> (i32, i32) {
    %c0_i32 = arith.constant 0 : i32
    %c0_i32_0 = arith.constant 0 : i32
    %c0_i32_1 = arith.constant 0 : i32
    return %c0_i32, %c0_i32_0 : i32, i32
  }
  func.func @transform_2(%arg0: i32) -> (i32, i32) {
    %c0_i32 = arith.constant 0 : i32
    %c0_i32_0 = arith.constant 0 : i32
    %c0_i32_1 = arith.constant 0 : i32
    return %c0_i32, %c0_i32_0 : i32, i32
  }
  func.func @transform_3(%arg0: i32) -> (i32, i32) {
    %c0_i32 = arith.constant 0 : i32
    %c0_i32_0 = arith.constant 0 : i32
    return %arg0, %c0_i32 : i32, i32
  }
}

</mosaic_0001>

<llo_original>
// kernel: tpu_custom_call.1
$region0: #{tpu_custom_call.1}
  #allocation0 [shape = 'u32[]', space=smem, size = 0x4, offset = 0x4, fixed_abs, tag = 'smem constant byte address 0x4 - core index']
  #allocation1 [shape = 'u32[144,128]{1,0:T(1,128)}', space=vmem, size = 0x12000, scoped, tag = 'internal scratch']
  %s0 = inlined_call_operand.vmem [shape: f32[160,32], index: 0, kind: input, shape index: {}]
  %s1 = inlined_call_operand.vmem [shape: f32[32,32], index: 1, kind: input, shape index: {}]
  %s2 = inlined_call_operand.vmem [shape: f32[1,32], index: 2, kind: input, shape index: {}]
  %s3 = inlined_call_operand.vmem [shape: f32[160,32], index: 3, kind: output, shape index: {}]
  %s4 = sld [smem:[#allocation0]]
  $region22: #{tpu_custom_call.1} parent=0
    _
  %s6 = ssub.s32 1, %s4
  %s7 = scalar_select 0, %s6, %s4
  // Predicated region
  $region2: #{tpu_custom_call.1} parent=0 // pred_check
    _
  $region3: #{tpu_custom_call.1} parent=0 // pred_check_branch
    %9 = sbr.rel (0) target = $region5
  $region4: #{tpu_custom_call.1} parent=0 // pred_region
    _
  $region5: #{tpu_custom_call.1} parent=0 // pred_fallthru
    _
  // Predicated region
  $region6: #{tpu_custom_call.1} parent=0 // pred_check
    _
  $region7: #{tpu_custom_call.1} parent=0 // pred_check_branch
    %11 = sbr.rel (0) target = $region9
  $region8: #{tpu_custom_call.1} parent=0 // pred_region
    _
  $region9: #{tpu_custom_call.1} parent=0 // pred_fallthru
    _
  // Predicated region
  $region10: #{tpu_custom_call.1} parent=0 // pred_check
    _
  $region11: #{tpu_custom_call.1} parent=0 // pred_check_branch
    %13 = sbr.rel (0) target = $region13
  $region12: #{tpu_custom_call.1} parent=0 // pred_region
    _
  $region13: #{tpu_custom_call.1} parent=0 // pred_fallthru
    _
  %v14 = vld [vmem:[%s0] sm:$0xff]
  %v15 = vld [vmem:[%s0 + $0x8] sm:$0xff]
  %v16 = vld [vmem:[%s0 + $0x10] sm:$0xff]
  %v17 = vld [vmem:[%s0 + $0x18] sm:$0xff]
  %v18 = vld [vmem:[%s0 + $0x20] sm:$0xff]
  %v19 = vld [vmem:[%s0 + $0x28] sm:$0xff]
  %v20 = vld [vmem:[%s0 + $0x30] sm:$0xff]
  %v21 = vld [vmem:[%s0 + $0x38] sm:$0xff]
  %v22 = vld [vmem:[%s0 + $0x40] sm:$0xff]
  %v23 = vld [vmem:[%s0 + $0x48] sm:$0xff]
  %v24 = vld [vmem:[%s0 + $0x50] sm:$0xff]
  %v25 = vld [vmem:[%s0 + $0x58] sm:$0xff]
  %v26 = vld [vmem:[%s0 + $0x60] sm:$0xff]
  %v27 = vld [vmem:[%s0 + $0x68] sm:$0xff]
  %v28 = vld [vmem:[%s0 + $0x70] sm:$0xff]
  %v29 = vld [vmem:[%s0 + $0x78] sm:$0xff]
  %v30 = vld [vmem:[%s0 + $0x80] sm:$0xff]
  %v31 = vld [vmem:[%s0 + $0x88] sm:$0xff]
  %v32 = vld [vmem:[%s0 + $0x90] sm:$0xff]
  %v33 = vld [vmem:[%s0 + $0x98] sm:$0xff]
  %v34 = vld [vmem:[%s1] sm:$0xff]
  %v35 = vld [vmem:[%s1 + $0x8] sm:$0xff]
  %v36 = vld [vmem:[%s1 + $0x10] sm:$0xff]
  %v37 = vld [vmem:[%s1 + $0x18] sm:$0xff]
  %v38 = vld [vmem:[%s2] sm:$0x1]
  %v40 = vlaneseq
  %v41 = vshrl.u32 %v40, 7
  %v42 = vsub.s32 0, %v41
  %v43 = vrot.slane %v38, %v42
  %vm45 = vcmask 261120
  %v47 = vsel %vm45, %v14, 0
  %v50 = vsel %vm45, %v15, 0
  %v53 = vsel %vm45, %v16, 0
  %v56 = vsel %vm45, %v17, 0
  %v59 = vsel %vm45, %v18, 0
  %v62 = vsel %vm45, %v19, 0
  %v65 = vsel %vm45, %v20, 0
  %v68 = vsel %vm45, %v21, 0
  %v71 = vsel %vm45, %v22, 0
  %v74 = vsel %vm45, %v23, 0
  %v77 = vsel %vm45, %v24, 0
  %v80 = vsel %vm45, %v25, 0
  %v83 = vsel %vm45, %v26, 0
  %v86 = vsel %vm45, %v27, 0
  %v89 = vsel %vm45, %v28, 0
  %v92 = vsel %vm45, %v29, 0
  %v95 = vsel %vm45, %v30, 0
  %v98 = vsel %vm45, %v31, 0
  %v101 = vsel %vm45, %v32, 0
  %v104 = vsel %vm45, %v33, 0
  %106 = vmatprep.subr.mxu0 0.0
  %107 = vmatpush1.msra.mxu0 %v34
  %108 = vmatprep.subr.mxu0 0.0
  %109 = vmatpush1.msra.mxu0 %v35
  %110 = vmatprep.subr.mxu0 0.0
  %111 = vmatpush1.msra.mxu0 %v36
  %112 = vmatprep.subr.mxu0 0.0
  %113 = vmatpush1.msra.mxu0 %v37
  %114 = vmatprep.subr.mxu0 0.0
  %115 = vmatpush1.msra.mxu0 0.0
  %116 = vmatprep.subr.mxu0 0.0
  %117 = vmatpush1.msra.mxu0 0.0
  %118 = vmatprep.subr.mxu0 0.0
  %119 = vmatpush1.msra.mxu0 0.0
  %120 = vmatprep.subr.mxu0 0.0
  %121 = vmatpush1.msra.mxu0 0.0
  %122 = vmatprep.subr.mxu0 0.0
  %123 = vmatpush1.msra.mxu0 0.0
  %124 = vmatprep.subr.mxu0 0.0
  %125 = vmatpush1.msra.mxu0 0.0
  %126 = vmatprep.subr.mxu0 0.0
  %127 = vmatpush1.msra.mxu0 0.0
  %128 = vmatprep.subr.mxu0 0.0
  %129 = vmatpush1.msra.mxu0 0.0
  %130 = vmatprep.subr.mxu0 0.0
  %131 = vmatpush1.msra.mxu0 0.0
  %132 = vmatprep.subr.mxu0 0.0
  %133 = vmatpush1.msra.mxu0 0.0
  %134 = vmatprep.subr.mxu0 0.0
  %135 = vmatpush1.msra.mxu0 0.0
  %136 = vmatprep.subr.mxu0 0.0
  %137 = vmatpush1.msra.mxu0 0.0
  %138 = vmatprep.subr.mxu0 0.0
  %139 = vmatpush1.msra.mxu0 0.0
  %140 = vmatprep.subr.mxu0 0.0
  %141 = vmatpush1.msra.mxu0 0.0
  %142 = vmatprep.subr.mxu0 0.0
  %143 = vmatpush1.msra.mxu0 0.0
  %144 = vmatprep.subr.mxu0 0.0
  %145 = vmatpush1.msra.mxu0 0.0
  %146 = vmatprep.subr.mxu0 0.0
  %147 = vmatpush1.msra.mxu0 0.0
  %148 = vmatprep.subr.mxu0 0.0
  %149 = vmatpush1.msra.mxu0 0.0
  %150 = vmatprep.subr.mxu0 0.0
  %151 = vmatpush1.msra.mxu0 0.0
  %152 = vmatprep.subr.mxu0 0.0
  %153 = vmatpush1.msra.mxu0 0.0
  %154 = vmatprep.subr.mxu0 0.0
  %155 = vmatpush1.msra.mxu0 0.0
  %156 = vmatprep.subr.mxu0 0.0
  %157 = vmatpush1.msra.mxu0 0.0
  %158 = vmatprep.subr.mxu0 0.0
  %159 = vmatpush1.msra.mxu0 0.0
  %160 = vmatprep.subr.mxu0 0.0
  %161 = vmatpush1.msra.mxu0 0.0
  %162 = vmatprep.subr.mxu0 0.0
  %163 = vmatpush1.msra.mxu0 0.0
  %164 = vmatprep.subr.mxu0 0.0
  %165 = vmatpush1.msra.mxu0 0.0
  %166 = vmatprep.subr.mxu0 0.0
  %167 = vmatpush1.msra.mxu0 0.0
  %168 = vmatprep.subr.mxu0 0.0
  %169 = vmatpush1.msra.mxu0 0.0
  %170 = vmatprep.mubr.f32.mxu0 0.0
  %171 = vmatmul.mubr.f32.gmra.mrb[0].mxu0 %v47
  %v172 = vpop.f32.mrb[0].mxu0
  %v173 = vadd.f32 %v43, %v172
  %v174 = vpop.f32.mrb[0].mxu0
  %175 = vmatprep.mubr.f32.mxu0 0.0
  %176 = vmatmul.mubr.f32.gmra.mrb[0].mxu0 %v50
  %v177 = vpop.f32.mrb[0].mxu0
  %v178 = vadd.f32 %v43, %v177
  %v179 = vpop.f32.mrb[0].mxu0
  %180 = vmatprep.mubr.f32.mxu0 0.0
  %181 = vmatmul.mubr.f32.gmra.mrb[0].mxu0 %v53
  %v182 = vpop.f32.mrb[0].mxu0
  %v183 = vadd.f32 %v43, %v182
  %v184 = vpop.f32.mrb[0].mxu0
  %185 = vmatprep.mubr.f32.mxu0 0.0
  %186 = vmatmul.mubr.f32.gmra.mrb[0].mxu0 %v56
  %v187 = vpop.f32.mrb[0].mxu0
  %v188 = vadd.f32 %v43, %v187
  %v189 = vpop.f32.mrb[0].mxu0
  %190 = vmatprep.mubr.f32.mxu0 0.0
  %191 = vmatmul.mubr.f32.gmra.mrb[0].mxu0 %v59
  %v192 = vpop.f32.mrb[0].mxu0
  %v193 = vadd.f32 %v43, %v192
  %v194 = vpop.f32.mrb[0].mxu0
  %195 = vmatprep.mubr.f32.mxu0 0.0
  %196 = vmatmul.mubr.f32.gmra.mrb[0].mxu0 %v62
  %v197 = vpop.f32.mrb[0].mxu0
  %v198 = vadd.f32 %v43, %v197
  %v199 = vpop.f32.mrb[0].mxu0
  %200 = vmatprep.mubr.f32.mxu0 0.0
  %201 = vmatmul.mubr.f32.gmra.mrb[0].mxu0 %v65
  %v202 = vpop.f32.mrb[0].mxu0
  %v203 = vadd.f32 %v43, %v202
  %v204 = vpop.f32.mrb[0].mxu0
  %205 = vmatprep.mubr.f32.mxu0 0.0
  %206 = vmatmul.mubr.f32.gmra.mrb[0].mxu0 %v68
  %v207 = vpop.f32.mrb[0].mxu0
  %v208 = vadd.f32 %v43, %v207
  %v209 = vpop.f32.mrb[0].mxu0
  %210 = vmatprep.mubr.f32.mxu0 0.0
  %211 = vmatmul.mubr.f32.gmra.mrb[0].mxu0 %v71
  %v212 = vpop.f32.mrb[0].mxu0
  %v213 = vadd.f32 %v43, %v212
  %v214 = vpop.f32.mrb[0].mxu0
  %215 = vmatprep.mubr.f32.mxu0 0.0
  %216 = vmatmul.mubr.f32.gmra.mrb[0].mxu0 %v74
  %v217 = vpop.f32.mrb[0].mxu0
  %v218 = vadd.f32 %v43, %v217
  %v219 = vpop.f32.mrb[0].mxu0
  %220 = vmatprep.mubr.f32.mxu0 0.0
  %221 = vmatmul.mubr.f32.gmra.mrb[0].mxu0 %v77
  %v222 = vpop.f32.mrb[0].mxu0
  %v223 = vadd.f32 %v43, %v222
  %v224 = vpop.f32.mrb[0].mxu0
  %225 = vmatprep.mubr.f32.mxu0 0.0
  %226 = vmatmul.mubr.f32.gmra.mrb[0].mxu0 %v80
  %v227 = vpop.f32.mrb[0].mxu0
  %v228 = vadd.f32 %v43, %v227
  %v229 = vpop.f32.mrb[0].mxu0
  %230 = vmatprep.mubr.f32.mxu0 0.0
  %231 = vmatmul.mubr.f32.gmra.mrb[0].mxu0 %v83
  %v232 = vpop.f32.mrb[0].mxu0
  %v233 = vadd.f32 %v43, %v232
  %v234 = vpop.f32.mrb[0].mxu0
  %235 = vmatprep.mubr.f32.mxu0 0.0
  %236 = vmatmul.mubr.f32.gmra.mrb[0].mxu0 %v86
  %v237 = vpop.f32.mrb[0].mxu0
  %v238 = vadd.f32 %v43, %v237
  %v239 = vpop.f32.mrb[0].mxu0
  %240 = vmatprep.mubr.f32.mxu0 0.0
  %241 = vmatmul.mubr.f32.gmra.mrb[0].mxu0 %v89
  %v242 = vpop.f32.mrb[0].mxu0
  %v243 = vadd.f32 %v43, %v242
  %v244 = vpop.f32.mrb[0].mxu0
  %245 = vmatprep.mubr.f32.mxu0 0.0
  %246 = vmatmul.mubr.f32.gmra.mrb[0].mxu0 %v92
  %v247 = vpop.f32.mrb[0].mxu0
  %v248 = vadd.f32 %v43, %v247
  %v249 = vpop.f32.mrb[0].mxu0
  %250 = vmatprep.mubr.f32.mxu0 0.0
  %251 = vmatmul.mubr.f32.gmra.mrb[0].mxu0 %v95
  %v252 = vpop.f32.mrb[0].mxu0
  %v253 = vadd.f32 %v43, %v252
  %v254 = vpop.f32.mrb[0].mxu0
  %255 = vmatprep.mubr.f32.mxu0 0.0
  %256 = vmatmul.mubr.f32.gmra.mrb[0].mxu0 %v98
  %v257 = vpop.f32.mrb[0].mxu0
  %v258 = vadd.f32 %v43, %v257
  %v259 = vpop.f32.mrb[0].mxu0
  %260 = vmatprep.mubr.f32.mxu0 0.0
  %261 = vmatmul.mubr.f32.gmra.mrb[0].mxu0 %v101
  %v262 = vpop.f32.mrb[0].mxu0
  %v263 = vadd.f32 %v43, %v262
  %v264 = vpop.f32.mrb[0].mxu0
  %265 = vmatprep.mubr.f32.mxu0 0.0
  %266 = vmatmul.mubr.f32.gmra.mrb[0].mxu0 %v104
  %v267 = vpop.f32.mrb[0].mxu0
  %v268 = vadd.f32 %v43, %v267
  %v269 = vpop.f32.mrb[0].mxu0
  %270 = vdwg.mxu0
  %271 = vst.msk [vmem:[%s3] sm:$0xff] %vm45, %v173
  %272 = vst.msk [vmem:[%s3 + $0x8] sm:$0xff] %vm45, %v178
  %273 = vst.msk [vmem:[%s3 + $0x10] sm:$0xff] %vm45, %v183
  %274 = vst.msk [vmem:[%s3 + $0x18] sm:$0xff] %vm45, %v188
  %275 = vst.msk [vmem:[%s3 + $0x20] sm:$0xff] %vm45, %v193
  %276 = vst.msk [vmem:[%s3 + $0x28] sm:$0xff] %vm45, %v198
  %277 = vst.msk [vmem:[%s3 + $0x30] sm:$0xff] %vm45, %v203
  %278 = vst.msk [vmem:[%s3 + $0x38] sm:$0xff] %vm45, %v208
  %279 = vst.msk [vmem:[%s3 + $0x40] sm:$0xff] %vm45, %v213
  %280 = vst.msk [vmem:[%s3 + $0x48] sm:$0xff] %vm45, %v218
  %281 = vst.msk [vmem:[%s3 + $0x50] sm:$0xff] %vm45, %v223
  %282 = vst.msk [vmem:[%s3 + $0x58] sm:$0xff] %vm45, %v228
  %283 = vst.msk [vmem:[%s3 + $0x60] sm:$0xff] %vm45, %v233
  %284 = vst.msk [vmem:[%s3 + $0x68] sm:$0xff] %vm45, %v238
  %285 = vst.msk [vmem:[%s3 + $0x70] sm:$0xff] %vm45, %v243
  %286 = vst.msk [vmem:[%s3 + $0x78] sm:$0xff] %vm45, %v248
  %287 = vst.msk [vmem:[%s3 + $0x80] sm:$0xff] %vm45, %v253
  %288 = vst.msk [vmem:[%s3 + $0x88] sm:$0xff] %vm45, %v258
  %289 = vst.msk [vmem:[%s3 + $0x90] sm:$0xff] %vm45, %v263
  %290 = vst.msk [vmem:[%s3 + $0x98] sm:$0xff] %vm45, %v268
  // Predicated region
  $region14: #{tpu_custom_call.1} parent=0 // pred_check
    _
  $region15: #{tpu_custom_call.1} parent=0 // pred_check_branch
    %292 = sbr.rel (0) target = $region17
  $region16: #{tpu_custom_call.1} parent=0 // pred_region
    _
  $region17: #{tpu_custom_call.1} parent=0 // pred_fallthru
    _
  // Predicated region
  $region18: #{tpu_custom_call.1} parent=0 // pred_check
    _
  $region19: #{tpu_custom_call.1} parent=0 // pred_check_branch
    %294 = sbr.rel (0) target = $region21
  $region20: #{tpu_custom_call.1} parent=0 // pred_region
    _
  $region21: #{tpu_custom_call.1} parent=0 // pred_fallthru
    _

</llo_original>
